<compile_context>
chip_gen: v6e
topology: v6e:2x2x1
jax: 0.10.0
libtpu: 0.0.40
codegen_flags: <defaults>
</compile_context>

<pallas_src>
import jax
import jax.numpy as jnp
from jax.experimental import pallas as pl
from jax.experimental.pallas import tpu as pltpu


def _round_up(x, m):
    return ((x + m - 1) // m) * m


def _choose_row_tile(M, tm_max=1024):
    """Pick a row tile that minimizes padded rows, preferring large tiles,
    and (when free) gives >= 2 grid steps so v7x can use both TensorCores."""
    floor = 64 if M >= 64 else 8
    cands = [t for t in (1024, 512, 256, 128, 64, 32, 16, 8) if floor <= t <= tm_max]
    best = min(cands, key=lambda t: (_round_up(M, t), -t))
    if _round_up(M, best) // best < 2:
        smaller = [t for t in cands if t < best and _round_up(M, t) == _round_up(M, best)]
        if smaller:
            best = max(smaller)   # same padding, >= 2 steps
    return best


def mlp_kernel(x_ref, w1_ref, b1_ref, w2_ref, b2_ref, o_ref, acc_ref):
    # Grid: (row tile i, dff chunk k).  Output block is resident across k.
    k = pl.program_id(1)

    @pl.when(k == 0)
    def _():
        acc_ref[...] = jnp.zeros_like(acc_ref)

    x = x_ref[...].astype(jnp.bfloat16)                                  # f32 -> bf16 on VPU
    h = jnp.dot(x, w1_ref[...], preferred_element_type=jnp.float32)      # MXU, f32 acc
    h = jnp.maximum(h + b1_ref[...], 0.0)                                # bias + ReLU in f32
    acc_ref[...] += jnp.dot(h.astype(jnp.bfloat16), w2_ref[...],
                            preferred_element_type=jnp.float32)          # MXU, f32 acc

    @pl.when(k == pl.num_programs(1) - 1)
    def _():
        # Dropout == identity (eval mode).
        o_ref[...] = (acc_ref[...] + b2_ref[...]).astype(o_ref.dtype)


def prepare_mlp_params(w1, b1, w2, b2, *, tk_max=2048):
    """One-time weight prep (pad + bf16 cast).  Cache the result and reuse it
    across calls so weights are not re-passed through HBM every forward."""
    D, dff = w1.shape
    Dp = _round_up(D, 128)                       # lane-dense output side only
    tk = dff if dff <= tk_max else tk_max        # dff chunk (full dff when small)
    dffp = _round_up(dff, tk)

    w1p = jnp.pad(w1, ((0, 0), (0, dffp - dff))).astype(jnp.bfloat16)        # (D, dffp)
    b1p = jnp.pad(b1.reshape(1, -1), ((0, 0), (0, dffp - dff))).astype(jnp.float32)
    w2p = jnp.pad(w2, ((0, dffp - dff), (0, Dp - D))).astype(jnp.bfloat16)   # (dffp, Dp)
    b2p = jnp.pad(b2.reshape(1, -1), ((0, 0), (0, Dp - D))).astype(jnp.float32)
    # Zero-padded dff columns/rows contribute relu(0)=0 -> exact.
    return dict(w1=w1p, b1=b1p, w2=w2p, b2=b2p,
                d_model=D, dff=dff, dffp=dffp, Dp=Dp, tk=tk)


def mlp_forward(x, params, *, tm_max=1024, out_dtype=None):
    """x: [B, S, d_model] -> [B, S, d_model].  out_dtype=jnp.bfloat16 halves
    writeback traffic when the caller tolerates it; default keeps x.dtype."""
    B, S, D = x.shape
    assert D == params["d_model"]
    out_dtype = x.dtype if out_dtype is None else out_dtype
    Dp, dffp, tk = params["Dp"], params["dffp"], params["tk"]
    kt = dffp // tk

    M = B * S
    Mt = _choose_row_tile(M, tm_max)
    Mp = _round_up(M, Mt)

    x2 = x.reshape(M, D)
    if Mp != M:
        x2 = jnp.pad(x2, ((0, Mp - M), (0, 0)))   # rows only; no contraction-dim pad

    out_bytes = jnp.dtype(out_dtype).itemsize
    nbuf_w = 1 if kt == 1 else 2
    bytes_needed = (
        2 * Mt * D * 4                        # x tile, f32, double-buffered
        + 2 * Mt * Dp * out_bytes             # out tile, double-buffered
        + Mt * Dp * 4                         # f32 accumulator scratch
        + nbuf_w * (D * tk + tk * Dp) * 2     # W1 / W2 blocks, bf16
        + nbuf_w * 8 * tk * 4 + 8 * Dp * 4    # biases (sublane-padded f32)
        + Mt * D * 2                          # in-kernel bf16 copy of x
        + Mt * tk * (4 + 2)                   # intermediate h (f32) + bf16 copy
    )
    try:
        vmem_cap = int(pltpu.get_tpu_info().vmem_capacity_bytes)
    except Exception:
        vmem_cap = 64 << 20                   # conservative: v7x per-TC size
    vmem_limit = int(min(max(int(1.25 * bytes_needed), 8 << 20), int(0.85 * vmem_cap)))

    cost = pl.CostEstimate(
        flops=2 * Mp * D * dffp + 2 * Mp * dffp * Dp,
        transcendentals=0,
        bytes_accessed=(Mp * D * 4 + (D * dffp + dffp * Dp) * 2
                        + (dffp + Dp) * 4 + Mp * Dp * out_bytes),
    )

    w_mode = dict(pipeline_mode=pl.Buffered(1)) if kt == 1 else {}
    grid_spec = pltpu.PrefetchScalarGridSpec(
        num_scalar_prefetch=0,
        grid=(Mp // Mt, kt),
        in_specs=[
            pl.BlockSpec((Mt, D), lambda i, k: (i, 0)),                       # x rows (f32)
            pl.BlockSpec((D, tk), lambda i, k: (0, k), **w_mode),             # W1 chunk
            pl.BlockSpec((1, tk), lambda i, k: (0, k), **w_mode),             # b1 chunk
            pl.BlockSpec((tk, Dp), lambda i, k: (k, 0), **w_mode),            # W2 chunk
            pl.BlockSpec((1, Dp), lambda i, k: (0, 0), pipeline_mode=pl.Buffered(1)),  # b2
        ],
        out_specs=pl.BlockSpec((Mt, Dp), lambda i, k: (i, 0)),
        scratch_shapes=[pltpu.VMEM((Mt, Dp), jnp.float32)],
    )

    out2 = pl.pallas_call(
        mlp_kernel,
        out_shape=jax.ShapeDtypeStruct((Mp, Dp), out_dtype),
        grid_spec=grid_spec,
        compiler_params=pltpu.CompilerParams(
            dimension_semantics=("parallel", "arbitrary"),
            vmem_limit_bytes=vmem_limit,
        ),
        cost_estimate=cost,
    )(x2, params["w1"], params["b1"], params["w2"], params["b2"])

    if Mp != M or Dp != D:
        out2 = out2[:M, :D]
    return out2.reshape(B, S, D)


def make_params(key, d_model=64, dff=256, dtype=jnp.float32):
    k1, k2, k3, k4 = jax.random.split(key, 4)
    # PyTorch Linear init: U(-1/sqrt(fan_in), 1/sqrt(fan_in)); deterministic here.
    lim1 = 1.0 / (d_model ** 0.5)
    lim2 = 1.0 / (dff ** 0.5)
    w1 = jax.random.uniform(k1, (d_model, dff), dtype, -lim1, lim1)
    b1 = jax.random.uniform(k2, (1, dff), dtype, -lim1, lim1)
    w2 = jax.random.uniform(k3, (dff, d_model), dtype, -lim2, lim2)
    b2 = jax.random.uniform(k4, (1, d_model), dtype, -lim2, lim2)
    return w1, b1, w2, b2


if __name__ == "__main__":
    d_model, dff = 64, 256
    B, S = 2, 8

    key = jax.random.PRNGKey(0)
    kx, kp = jax.random.split(key)
    x = jax.random.normal(kx, (B, S, d_model), jnp.float32)
    w1, b1, w2, b2 = make_params(kp, d_model, dff)

    # Prepare (pad + bf16-cast) weights ONCE; reuse across forward calls.
    params = prepare_mlp_params(w1, b1, w2, b2)

    out = mlp_forward(x, params)
    out = jax.block_until_ready(out)

    # Reference check against plain JAX (f32); bf16 MXU path -> loose tolerance.
    ref = jnp.maximum(x.reshape(-1, d_model) @ w1 + b1, 0.0) @ w2 + b2
    ref = ref.reshape(B, S, d_model)
    assert out.shape == ref.shape
    assert jnp.allclose(out, ref, atol=2e-2, rtol=2e-2), "mismatch vs reference"

    print("KERNEL_OK")
</pallas_src>

<mosaic_0001>
module attributes {stable_mosaic.version = 11 : i64} {
  func.func @mlp_kernel(%arg0: i32, %arg1: i32, %arg2: memref<8x64xf32, #tpu.memory_space<vmem>>, %arg3: memref<64x256xbf16, #tpu.memory_space<vmem>>, %arg4: memref<1x256xf32, #tpu.memory_space<vmem>>, %arg5: memref<256x128xbf16, #tpu.memory_space<vmem>>, %arg6: memref<1x128xf32, #tpu.memory_space<vmem>>, %arg7: memref<8x128xf32, #tpu.memory_space<vmem>>, %arg8: memref<8x128xf32, #tpu.memory_space<vmem>>) attributes {dimension_semantics = [#tpu.dimension_semantics<parallel>, #tpu.dimension_semantics<arbitrary>], iteration_bounds = array<i64: 2, 1>, scalar_prefetch = 0 : i64, scratch_operands = 1 : i64, tpu.core_type = #tpu.core_type<tc>, window_params = [{transform_indices = @transform_0, window_bounds = array<i64: 8, 64>}, {pipeline_mode = #tpu.pipeline_mode<synchronous>, transform_indices = @transform_1, window_bounds = array<i64: 64, 256>}, {pipeline_mode = #tpu.pipeline_mode<synchronous>, transform_indices = @transform_2, window_bounds = array<i64: 1, 256>}, {pipeline_mode = #tpu.pipeline_mode<synchronous>, transform_indices = @transform_3, window_bounds = array<i64: 256, 128>}, {pipeline_mode = #tpu.pipeline_mode<synchronous>, transform_indices = @transform_4, window_bounds = array<i64: 1, 128>}, {transform_indices = @transform_5, window_bounds = array<i64: 8, 128>}]} {
    %c0_i32 = arith.constant 0 : i32
    %0 = arith.cmpi eq, %arg1, %c0_i32 : i32
    %1 = arith.extui %0 : i1 to i32
    %c0_i32_0 = arith.constant 0 : i32
    %2 = arith.cmpi ne, %1, %c0_i32_0 : i32
    scf.if %2 {
      %cst_16 = arith.constant 0.000000e+00 : f32
      %21 = vector.broadcast %cst_16 : f32 to vector<8x128xf32>
      %c0_17 = arith.constant 0 : index
      %c0_18 = arith.constant 0 : index
      %22 = vector.load %arg8[%c0_17, %c0_18] : memref<8x128xf32, #tpu.memory_space<vmem>>, vector<8x128xf32>
      tpu.vector_store %arg8[%c0_17, %c0_18], %21 {strides = array<i32>} : memref<8x128xf32, #tpu.memory_space<vmem>>, vector<8x128xf32>,
    } else {
    }
    %c0 = arith.constant 0 : index
    %c0_1 = arith.constant 0 : index
    %3 = vector.load %arg2[%c0, %c0_1] : memref<8x64xf32, #tpu.memory_space<vmem>>, vector<8x64xf32>
    %4 = arith.truncf %3 : vector<8x64xf32> to vector<8x64xbf16>
    %c0_2 = arith.constant 0 : index
    %c0_3 = arith.constant 0 : index
    %5 = vector.load %arg3[%c0_2, %c0_3] : memref<64x256xbf16, #tpu.memory_space<vmem>>, vector<64x256xbf16>
    %cst = arith.constant dense<0.000000e+00> : vector<8x256xf32>
    %6 = tpu.matmul %4, %5, %cst {dimension_numbers = #tpu.dot_dimension_numbers<[1], [0], [0], [1], [0, 0, 1, 1], [], []>} : vector<8x64xbf16>, vector<64x256xbf16>, vector<8x256xf32> -> vector<8x256xf32>
    %c0_4 = arith.constant 0 : index
    %c0_5 = arith.constant 0 : index
    %7 = vector.load %arg4[%c0_4, %c0_5] : memref<1x256xf32, #tpu.memory_space<vmem>>, vector<1x256xf32>
    %8 = vector.broadcast %7 : vector<1x256xf32> to vector<8x256xf32>
    %9 = arith.addf %6, %8 : vector<8x256xf32>
    %cst_6 = arith.constant 0.000000e+00 : f32
    %10 = vector.broadcast %cst_6 : f32 to vector<8x256xf32>
    %11 = arith.maximumf %9, %10 : vector<8x256xf32>
    %c0_7 = arith.constant 0 : index
    %c0_8 = arith.constant 0 : index
    %12 = vector.load %arg8[%c0_7, %c0_8] : memref<8x128xf32, #tpu.memory_space<vmem>>, vector<8x128xf32>
    %13 = arith.truncf %11 : vector<8x256xf32> to vector<8x256xbf16>
    %c0_9 = arith.constant 0 : index
    %c0_10 = arith.constant 0 : index
    %14 = vector.load %arg5[%c0_9, %c0_10] : memref<256x128xbf16, #tpu.memory_space<vmem>>, vector<256x128xbf16>
    %cst_11 = arith.constant dense<0.000000e+00> : vector<8x128xf32>
    %15 = tpu.matmul %13, %14, %cst_11 {dimension_numbers = #tpu.dot_dimension_numbers<[1], [0], [0], [1], [0, 0, 1, 1], [], []>} : vector<8x256xbf16>, vector<256x128xbf16>, vector<8x128xf32> -> vector<8x128xf32>
    %16 = arith.addf %12, %15 : vector<8x128xf32>
    %c0_12 = arith.constant 0 : index
    %c0_13 = arith.constant 0 : index
    %17 = vector.load %arg8[%c0_12, %c0_13] : memref<8x128xf32, #tpu.memory_space<vmem>>, vector<8x128xf32>
    tpu.vector_store %arg8[%c0_12, %c0_13], %16 {strides = array<i32>} : memref<8x128xf32, #tpu.memory_space<vmem>>, vector<8x128xf32>,
    %c0_i32_14 = arith.constant 0 : i32
    %18 = arith.cmpi eq, %arg1, %c0_i32_14 : i32
    %19 = arith.extui %18 : i1 to i32
    %c0_i32_15 = arith.constant 0 : i32
    %20 = arith.cmpi ne, %19, %c0_i32_15 : i32
    scf.if %20 {
      %c0_16 = arith.constant 0 : index
      %c0_17 = arith.constant 0 : index
      %21 = vector.load %arg8[%c0_16, %c0_17] : memref<8x128xf32, #tpu.memory_space<vmem>>, vector<8x128xf32>
      %c0_18 = arith.constant 0 : index
      %c0_19 = arith.constant 0 : index
      %22 = vector.load %arg6[%c0_18, %c0_19] : memref<1x128xf32, #tpu.memory_space<vmem>>, vector<1x128xf32>
      %23 = vector.broadcast %22 : vector<1x128xf32> to vector<8x128xf32>
      %24 = arith.addf %21, %23 : vector<8x128xf32>
      %c0_20 = arith.constant 0 : index
      %c0_21 = arith.constant 0 : index
      %25 = vector.load %arg7[%c0_20, %c0_21] : memref<8x128xf32, #tpu.memory_space<vmem>>, vector<8x128xf32>
      tpu.vector_store %arg7[%c0_20, %c0_21], %24 {strides = array<i32>} : memref<8x128xf32, #tpu.memory_space<vmem>>, vector<8x128xf32>,
    } else {
    }
    return
  }
  func.func @transform_0(%arg0: i32, %arg1: i32) -> (i32, i32) {
    %c0_i32 = arith.constant 0 : i32
    %c0_i32_0 = arith.constant 0 : i32
    return %arg0, %c0_i32 : i32, i32
  }
  func.func @transform_1(%arg0: i32, %arg1: i32) -> (i32, i32) {
    %c0_i32 = arith.constant 0 : i32
    %c0_i32_0 = arith.constant 0 : i32
    return %c0_i32, %arg1 : i32, i32
  }
  func.func @transform_2(%arg0: i32, %arg1: i32) -> (i32, i32) {
    %c0_i32 = arith.constant 0 : i32
    %c0_i32_0 = arith.constant 0 : i32
    return %c0_i32, %arg1 : i32, i32
  }
  func.func @transform_3(%arg0: i32, %arg1: i32) -> (i32, i32) {
    %c0_i32 = arith.constant 0 : i32
    %c0_i32_0 = arith.constant 0 : i32
    return %arg1, %c0_i32 : i32, i32
  }
  func.func @transform_4(%arg0: i32, %arg1: i32) -> (i32, i32) {
    %c0_i32 = arith.constant 0 : i32
    %c0_i32_0 = arith.constant 0 : i32
    %c0_i32_1 = arith.constant 0 : i32
    return %c0_i32, %c0_i32_0 : i32, i32
  }
  func.func @transform_5(%arg0: i32, %arg1: i32) -> (i32, i32) {
    %c0_i32 = arith.constant 0 : i32
    %c0_i32_0 = arith.constant 0 : i32
    return %arg0, %c0_i32 : i32, i32
  }
}

</mosaic_0001>

<llo_original>
// kernel: tpu_custom_call.1
$region0: #{tpu_custom_call.1}
  #allocation0 [shape = 'u32[]', space=smem, size = 0x4, offset = 0x4, fixed_abs, tag = 'smem constant byte address 0x4 - core index']
  #allocation1 [shape = 'u32[144,128]{1,0:T(1,128)}', space=vmem, size = 0x12000, scoped, tag = 'internal scratch']
  #allocation2 [shape = 'f32[8,128]{1,0:T(8,128)}', space=vmem, size = 0x1000, scoped, tag = 'scratch operand']
  %s0 = inlined_call_operand.hbm [shape: f32[16,64], index: 0, kind: input, shape index: {}]
  %s1 = inlined_call_operand.hbm [shape: bf16[64,256], index: 1, kind: input, shape index: {}]
  %s2 = inlined_call_operand.vmem [shape: f32[1,256], index: 2, kind: input, shape index: {}]
  %s3 = inlined_call_operand.hbm [shape: bf16[256,128], index: 3, kind: input, shape index: {}]
  %s4 = inlined_call_operand.vmem [shape: f32[1,128], index: 4, kind: input, shape index: {}]
  %s5 = inlined_call_operand.hbm [shape: f32[16,128], index: 5, kind: output, shape index: {}]
  %s6 = sld [smem:[#allocation0]]
  $region73: #{tpu_custom_call.1} parent=0
    _
  %s8 = ssub.s32 1, %s6
  %s9 = scalar_select 0, %s8, %s6
  $region1: #{tpu_custom_call.1} parent=0
    #allocation3 [shape = 'u8[8192]{0}', space=vmem, size = 0x2000, scoped, tag = 'input window, operand 0']
    #allocation4 [shape = 's32[2]{0}', space=sflag, size = 0x8, scoped, tag = 'scoped memory for tpu_custom_call.1']
    #allocation5 [shape = 's32[2]{0}', space=sflag, size = 0x8, scoped, tag = 'scoped memory for tpu_custom_call.1']
    #allocation6 [shape = 'u8[32768]{0}', space=vmem, size = 0x8000, scoped, tag = 'input window, operand 1, single buffered']
    #allocation7 [shape = 's32[1]{0}', space=sflag, size = 0x4, scoped, tag = 'scoped memory for tpu_custom_call.1']
    #allocation8 [shape = 'u8[65536]{0}', space=vmem, size = 0x10000, scoped, tag = 'input window, operand 3, single buffered']
    #allocation9 [shape = 'u8[8192]{0}', space=vmem, size = 0x2000, scoped, tag = 'output window, operand 0']
    %10 = vsyncpa [#allocation4], 0
    %s11 = scalar_lea.sflag [#allocation4], 1
    %12 = vsyncpa %s11, 0
    %13 = vsyncpa [#allocation7], 0
    %14 = vsyncpa [#allocation5], 0
    %s15 = scalar_lea.sflag [#allocation5], 1
    %16 = vsyncpa %s15, 0
    loop: start=0, step=1, limit=4
    $region2: #{tpu_custom_call.1} parent=1 // loop_pre_header
      _
    $region3: #{tpu_custom_call.1} parent=1 // loop_header
      %s18 = sphi 0, %s22
      %p19 = scmp.ge.s32.totalorder %s18, 4
      %s25 = sphi 0, %s37
      %s26 = sphi 0, %s33
      %s27 = sphi 0, %s25
      %s28 = sphi 0, %s26
      %s29 = sphi 0, %s27
      %s30 = sphi 0, %s28
      %s40 = sphi 0, %s42
      %s43 = sphi 0, %s40
      %s44 = sphi 0, %s43
      %s60 = sphi 0, %s44
      %s66 = sphi 0, %s68
      %s69 = sphi 0, %s66
      %s70 = sphi 0, %s69
      %s86 = sphi 0, %s70
      %s92 = sphi 0, %s94
      %s95 = sphi 0, %s92
      %s96 = sphi 0, %s95
      %s112 = sphi 0, %s96
      %s118 = sphi 0, %s120
      %s121 = sphi 0, %s118
      %s122 = sphi 0, %s121
      %s138 = sphi 0, %s122
      %s142 = sphi 0, %s142
      %s144 = sphi 0, %s142
      %s145 = sphi 0, %s144
      %s159 = sphi 0, %s145
      %s165 = sphi 0, %s167
      %s168 = sphi 0, %s165
      %s169 = sphi 0, %s168
      %s185 = sphi 0, %s169
    $region4: #{tpu_custom_call.1} parent=1 // loop_header_branch
      %21 = sbr.rel (%p19) target = $region8
    $region5: #{tpu_custom_call.1} parent=1 // loop_body
      %s23 = ssub.s32 %s18, 1
      %s24 = ssub.s32 %s18, 2
      %s31 = sadd.s32 1, %s26
      %p32 = scmp.ge.s32.totalorder %s31, 1
      %s33 = scalar_select %p32, 0, %s31
      %s34 = sadd.s32 1, %s25
      %s35 = scalar_select %p32, %s34, %s25
      %p36 = scmp.ge.s32.totalorder %s35, 2
      %s37 = scalar_select %p36, 0, %s35
      %s38 = ssub.s32 %s25, %s37
      %p39 = scmp.eq.s32.totalorder %s38, 0
      %s41 = sadd.s32 %s40, 1
      %s42 = scalar_select %p39, %s40, %s41
      %p45 = pneg %p39
      %p46 = scmp.eq.s32.totalorder %s18, 1
      %p47 = por %p45, %p46
      %p48 = scmp.ne.s32.totalorder %s40, %s43
      %p49 = scmp.eq.s32.totalorder %s18, 0
      %p50 = por %p48, %p49
      %p51 = scmp.ne.s32.totalorder %s40, %s43
      %p52 = scmp.eq.s32.totalorder %s23, 1
      %p53 = por %p51, %p52
      %p54 = scmp.ne.s32.totalorder %s43, %s44
      %p55 = scmp.eq.s32.totalorder %s23, 0
      %p56 = por %p54, %p55
      %p57 = scmp.ne.s32.totalorder %s43, %s44
      %p58 = scmp.eq.s32.totalorder %s24, 1
      %p59 = por %p57, %p58
      %p61 = scmp.ne.s32.totalorder %s44, %s60
      %p62 = scmp.eq.s32.totalorder %s24, 0
      %p63 = por %p61, %p62
      %s64 = ssub.s32 %s26, %s33
      %p65 = scmp.eq.s32.totalorder %s64, 0
      %s67 = sadd.s32 %s66, 1
      %s68 = scalar_select %p65, %s66, %s67
      %p71 = pneg %p65
      %p72 = scmp.eq.s32.totalorder %s18, 1
      %p73 = por %p71, %p72
      %p74 = scmp.ne.s32.totalorder %s66, %s69
      %p75 = scmp.eq.s32.totalorder %s18, 0
      %p76 = por %p74, %p75
      %p77 = scmp.ne.s32.totalorder %s66, %s69
      %p78 = scmp.eq.s32.totalorder %s23, 1
      %p79 = por %p77, %p78
      %p80 = scmp.ne.s32.totalorder %s69, %s70
      %p81 = scmp.eq.s32.totalorder %s23, 0
      %p82 = por %p80, %p81
      %p83 = scmp.ne.s32.totalorder %s69, %s70
      %p84 = scmp.eq.s32.totalorder %s24, 1
      %p85 = por %p83, %p84
      %p87 = scmp.ne.s32.totalorder %s70, %s86
      %p88 = scmp.eq.s32.totalorder %s24, 0
      %p89 = por %p87, %p88
      %s90 = ssub.s32 %s26, %s33
      %p91 = scmp.eq.s32.totalorder %s90, 0
      %s93 = sadd.s32 %s92, 1
      %s94 = scalar_select %p91, %s92, %s93
      %p97 = pneg %p91
      %p98 = scmp.eq.s32.totalorder %s18, 1
      %p99 = por %p97, %p98
      %p100 = scmp.ne.s32.totalorder %s92, %s95
      %p101 = scmp.eq.s32.totalorder %s18, 0
      %p102 = por %p100, %p101
      %p103 = scmp.ne.s32.totalorder %s92, %s95
      %p104 = scmp.eq.s32.totalorder %s23, 1
      %p105 = por %p103, %p104
      %p106 = scmp.ne.s32.totalorder %s95, %s96
      %p107 = scmp.eq.s32.totalorder %s23, 0
      %p108 = por %p106, %p107
      %p109 = scmp.ne.s32.totalorder %s95, %s96
      %p110 = scmp.eq.s32.totalorder %s24, 1
      %p111 = por %p109, %p110
      %p113 = scmp.ne.s32.totalorder %s96, %s112
      %p114 = scmp.eq.s32.totalorder %s24, 0
      %p115 = por %p113, %p114
      %s116 = ssub.s32 %s26, %s33
      %p117 = scmp.eq.s32.totalorder %s116, 0
      %s119 = sadd.s32 %s118, 1
      %s120 = scalar_select %p117, %s118, %s119
      %p123 = pneg %p117
      %p124 = scmp.eq.s32.totalorder %s18, 1
      %p125 = por %p123, %p124
      %p126 = scmp.ne.s32.totalorder %s118, %s121
      %p127 = scmp.eq.s32.totalorder %s18, 0
      %p128 = por %p126, %p127
      %p129 = scmp.ne.s32.totalorder %s118, %s121
      %p130 = scmp.eq.s32.totalorder %s23, 1
      %p131 = por %p129, %p130
      %p132 = scmp.ne.s32.totalorder %s121, %s122
      %p133 = scmp.eq.s32.totalorder %s23, 0
      %p134 = por %p132, %p133
      %p135 = scmp.ne.s32.totalorder %s121, %s122
      %p136 = scmp.eq.s32.totalorder %s24, 1
      %p137 = por %p135, %p136
      %p139 = scmp.ne.s32.totalorder %s122, %s138
      %p140 = scmp.eq.s32.totalorder %s24, 0
      %p141 = por %p139, %p140
      %s143 = sadd.s32 %s142, 1
      %p146 = scmp.eq.s32.totalorder %s18, 1
      %p147 = scmp.ne.s32.totalorder %s142, %s144
      %p148 = scmp.eq.s32.totalorder %s18, 0
      %p149 = por %p147, %p148
      %p150 = scmp.ne.s32.totalorder %s142, %s144
      %p151 = scmp.eq.s32.totalorder %s23, 1
      %p152 = por %p150, %p151
      %p153 = scmp.ne.s32.totalorder %s144, %s145
      %p154 = scmp.eq.s32.totalorder %s23, 0
      %p155 = por %p153, %p154
      %p156 = scmp.ne.s32.totalorder %s144, %s145
      %p157 = scmp.eq.s32.totalorder %s24, 1
      %p158 = por %p156, %p157
      %p160 = scmp.ne.s32.totalorder %s145, %s159
      %p161 = scmp.eq.s32.totalorder %s24, 0
      %p162 = por %p160, %p161
      %s163 = ssub.s32 %s25, %s37
      %p164 = scmp.eq.s32.totalorder %s163, 0
      %s166 = sadd.s32 %s165, 1
      %s167 = scalar_select %p164, %s165, %s166
      %p170 = pneg %p164
      %p171 = scmp.eq.s32.totalorder %s18, 1
      %p172 = por %p170, %p171
      %p173 = scmp.ne.s32.totalorder %s165, %s168
      %p174 = scmp.eq.s32.totalorder %s18, 0
      %p175 = por %p173, %p174
      %p176 = scmp.ne.s32.totalorder %s165, %s168
      %p177 = scmp.eq.s32.totalorder %s23, 1
      %p178 = por %p176, %p177
      %p179 = scmp.ne.s32.totalorder %s168, %s169
      %p180 = scmp.eq.s32.totalorder %s23, 0
      %p181 = por %p179, %p180
      %p182 = scmp.ne.s32.totalorder %s168, %s169
      %p183 = scmp.eq.s32.totalorder %s24, 1
      %p184 = por %p182, %p183
      %p186 = scmp.ne.s32.totalorder %s169, %s185
      %p187 = scmp.eq.s32.totalorder %s24, 0
      %p188 = por %p186, %p187
      %p189 = scmp.le.s32.totalorder 1, %s18
      %p190 = scmp.lt.s32.totalorder %s18, 3
      %p191 = pnand %p189, %p190
      %p192 = pneg %p191
      // Predicated region
      $region9: #{tpu_custom_call.1} parent=5 // pred_check
        _
      $region10: #{tpu_custom_call.1} parent=5 // pred_check_branch
        %194 = sbr.rel (%p191) target = $region12
      $region11: #{tpu_custom_call.1} parent=5 // pred_region
        %s195 = ssub.s32 %s18, 1
        // Predicated region
        $region13: #{tpu_custom_call.1} parent=11 // pred_check
          %p196 = pneg %p82
        $region14: #{tpu_custom_call.1} parent=11 // pred_check_branch
          %198 = sbr.rel (%p196) target = $region16
        $region15: #{tpu_custom_call.1} parent=11 // pred_region
          %s199 = smul.u32 2, %s28
          %s201 = ssub.s32 1024, 1024
          %202 = vsyncadd [#allocation7], %s201
          %s203 = smul.addr %s199, 64
          %s204 = scalar_lea.hbm %s1, %s203
          %s205 = sshll.u32 [#allocation6], 4
          %s206 = int_to_ptr.vmem [resolvable:$true] %s205
          %211 = dma.hbm_to_vmem [thread:$0]  %s204, 1024, %s206, [#allocation7], 128, 128, 8
        $region16: #{tpu_custom_call.1} parent=11 // pred_fallthru
          _
        // Predicated region
        $region17: #{tpu_custom_call.1} parent=11 // pred_check
          %p212 = pneg %p108
        $region18: #{tpu_custom_call.1} parent=11 // pred_check_branch
          %214 = sbr.rel (%p212) target = $region20
        $region19: #{tpu_custom_call.1} parent=11 // pred_region
          %s215 = smul.u32 2, %s28
          %p216 = scmp.lt.s32.totalorder %s215, 1
          %s217 = scalar_select %p216, %s215, 1
          %s218 = scalar_lea.vmem %s2, %s217
          %s219 = smul.u32 2, %s28
        $region20: #{tpu_custom_call.1} parent=11 // pred_fallthru
          _
        // Predicated region
        $region21: #{tpu_custom_call.1} parent=11 // pred_check
          %p220 = pneg %p134
        $region22: #{tpu_custom_call.1} parent=11 // pred_check_branch
          %222 = sbr.rel (%p220) target = $region24
        $region23: #{tpu_custom_call.1} parent=11 // pred_region
          %s223 = smul.u32 32, %s28
          %s225 = ssub.s32 2048, 2048
          %226 = vsyncadd [#allocation7], %s225
          %s227 = smul.addr %s223, 64
          %s228 = scalar_lea.hbm %s3, %s227
          %s229 = sshll.u32 [#allocation8], 4
          %s230 = int_to_ptr.vmem [resolvable:$true] %s229
          %235 = dma.hbm_to_vmem [thread:$0]  %s228, 2048, %s230, [#allocation7], 64, 64, 4
        $region24: #{tpu_custom_call.1} parent=11 // pred_fallthru
          _
        // Predicated region
        $region25: #{tpu_custom_call.1} parent=11 // pred_check
          %p236 = pneg %p155
        $region26: #{tpu_custom_call.1} parent=11 // pred_check_branch
          %238 = sbr.rel (%p236) target = $region28
        $region27: #{tpu_custom_call.1} parent=11 // pred_region
          _
        $region28: #{tpu_custom_call.1} parent=11 // pred_fallthru
          _
      $region12: #{tpu_custom_call.1} parent=5 // pred_fallthru
        _
      %p239 = scmp.lt.s32.totalorder %s18, 2
      // Predicated region
      $region29: #{tpu_custom_call.1} parent=5 // pred_check
        %p240 = pneg %p239
      $region30: #{tpu_custom_call.1} parent=5 // pred_check_branch
        %242 = sbr.rel (%p240) target = $region32
      $region31: #{tpu_custom_call.1} parent=5 // pred_region
        // Predicated region
        $region33: #{tpu_custom_call.1} parent=31 // pred_check
          %p243 = pneg %p50
        $region34: #{tpu_custom_call.1} parent=31 // pred_check_branch
          %245 = sbr.rel (%p243) target = $region36
        $region35: #{tpu_custom_call.1} parent=31 // pred_region
          %s246 = sand.u32 %s40, 1
          %s247 = scalar_lea.sflag [#allocation4], %s246
          %s248 = sand.u32 %s40, 1
          %s249 = smul.addr %s248, 8
          %s250 = scalar_lea.vmem [#allocation3], %s249
          %s252 = ssub.s32 128, 128
          %253 = vsyncadd %s247, %s252
          %s254 = smul.addr %s25, 128
          %s255 = scalar_lea.hbm %s0, %s254
          %s257 = sshll.u32 %s250, 4
          %s258 = int_to_ptr.vmem [resolvable:$true] %s257
          %260 = dma.hbm_to_vmem [thread:$0]  %s255, 128, %s258, %s247
        $region36: #{tpu_custom_call.1} parent=31 // pred_fallthru
          _
      $region32: #{tpu_custom_call.1} parent=5 // pred_fallthru
        _
      %p261 = scmp.le.s32.totalorder 1, %s18
      %p262 = scmp.lt.s32.totalorder %s18, 3
      %p263 = pnand %p261, %p262
      %p264 = pneg %p263
      // Predicated region
      $region37: #{tpu_custom_call.1} parent=5 // pred_check
        _
      $region38: #{tpu_custom_call.1} parent=5 // pred_check_branch
        %266 = sbr.rel (%p263) target = $region40
      $region39: #{tpu_custom_call.1} parent=5 // pred_region
        %s267 = ssub.s32 %s18, 1
        %s268 = sand.u32 %s43, 1
        %s269 = scalar_lea.sflag [#allocation4], %s268
        %s270 = sand.u32 %s43, 1
        %s271 = smul.addr %s270, 8
        %s272 = scalar_lea.vmem [#allocation3], %s271
        // Predicated region
        $region41: #{tpu_custom_call.1} parent=39 // pred_check
          %p273 = pneg %p56
        $region42: #{tpu_custom_call.1} parent=39 // pred_check_branch
          %275 = sbr.rel (%p273) target = $region44
        $region43: #{tpu_custom_call.1} parent=39 // pred_region
          %276 = dma.done %s269, 128
        $region44: #{tpu_custom_call.1} parent=39 // pred_fallthru
          _
        // Predicated region
        $region45: #{tpu_custom_call.1} parent=39 // pred_check
          %p277 = pneg %p82
        $region46: #{tpu_custom_call.1} parent=39 // pred_check_branch
          %279 = sbr.rel (%p277) target = $region48
        $region47: #{tpu_custom_call.1} parent=39 // pred_region
          %280 = dma.done [#allocation7], 1024
        $region48: #{tpu_custom_call.1} parent=39 // pred_fallthru
          _
        // Predicated region
        $region49: #{tpu_custom_call.1} parent=39 // pred_check
          %p281 = pneg %p134
        $region50: #{tpu_custom_call.1} parent=39 // pred_check_branch
          %283 = sbr.rel (%p281) target = $region52
        $region51: #{tpu_custom_call.1} parent=39 // pred_region
          %284 = dma.done [#allocation7], 2048
        $region52: #{tpu_custom_call.1} parent=39 // pred_fallthru
          _
        %s285 = sand.u32 %s43, 1
        %s286 = scalar_lea.sflag [#allocation4], %s285
        %s287 = sand.u32 %s43, 1
        %s288 = smul.addr %s287, 8
        %s289 = scalar_lea.vmem [#allocation3], %s288
        %p290 = pneg %p56
        %p291 = pneg %p53
        %p292 = pneg %p82
        %p293 = pneg %p79
        %s294 = smul.u32 2, %s28
        %p295 = scmp.lt.s32.totalorder %s294, 1
        %s296 = scalar_select %p295, %s294, 1
        %s297 = scalar_lea.vmem %s2, %s296
        %p298 = pneg %p108
        %p299 = pneg %p105
        %p300 = pneg %p134
        %p301 = pneg %p131
        %p302 = pneg %p155
        %p303 = pneg %p152
        %p304 = pneg %p181
        %p305 = pneg %p178
        %s306 = sand.u32 %s168, 1
        %s307 = scalar_lea.sflag [#allocation5], %s306
        %s308 = sand.u32 %s168, 1
        %s309 = smul.addr %s308, 8
        %s310 = scalar_lea.vmem [#allocation9], %s309
        %s311 = smul.u32 2, %s28
        %s312 = smul.u32 2, %s28
        %p313 = scmp.lt.s32.totalorder %s312, 1
        %s314 = scalar_select %p313, %s312, 1
        %s315 = scalar_lea.vmem %s2, %s314
        %s316 = smul.u32 2, %s28
        %s317 = smul.u32 32, %s28
        %p319 = scmp.eq.s32.totalorder %s28, 0
        // Predicated region
        $region53: #{tpu_custom_call.1} parent=39 // pred_check
          %p320 = pneg %p319
        $region54: #{tpu_custom_call.1} parent=39 // pred_check_branch
          %322 = sbr.rel (%p320) target = $region56
        $region55: #{tpu_custom_call.1} parent=39 // pred_region
          %323 = vst [vmem:[#allocation2] sm:$0xff] 0.0
        $region56: #{tpu_custom_call.1} parent=39 // pred_fallthru
          _
        %v324 = vld [vmem:[%s272] sm:$0xff]
        %v325 = vpack.c.bf16 %v324, %v324
        %v326 = vld [vmem:[#allocation6] sm:$0xff]
        %v327 = vld [vmem:[#allocation6 + $0x8] sm:$0xff]
        %v328 = vld [vmem:[#allocation6 + $0x10] sm:$0xff]
        %v329 = vld [vmem:[#allocation6 + $0x18] sm:$0xff]
        %v330 = vld [vmem:[#allocation6 + $0x20] sm:$0xff]
        %v331 = vld [vmem:[#allocation6 + $0x28] sm:$0xff]
        %v332 = vld [vmem:[#allocation6 + $0x30] sm:$0xff]
        %v333 = vld [vmem:[#allocation6 + $0x38] sm:$0xff]
        %v334 = vld [vmem:[%s315] sm:$0x3]
        %v336 = vlaneseq
        %v337 = vshrl.u32 %v336, 7
        %v338 = vsub.s32 0, %v337
        %v339 = vrot.slane %v334, %v338
        %v340 = vlaneseq
        %v341 = vshrl.u32 %v340, 7
        %v342 = vsub.s32 1, %v341
        %v343 = vrot.slane %v334, %v342
        %v354 = vunpack.c.l.b16 %v326
        %v355 = vunpack.c.h.b16 %v326
        %v356 = vunpack.c.l.b16 %v327
        %v357 = vunpack.c.h.b16 %v327
        %v358 = vunpack.c.l.b16 %v328
        %v359 = vunpack.c.h.b16 %v328
        %v360 = vunpack.c.l.b16 %v329
        %v361 = vunpack.c.h.b16 %v329
        %v362 = vunpack.c.l.b16 %v330
        %v363 = vunpack.c.h.b16 %v330
        %v364 = vunpack.c.l.b16 %v331
        %v365 = vunpack.c.h.b16 %v331
        %v366 = vunpack.c.l.b16 %v332
        %v367 = vunpack.c.h.b16 %v332
        %v368 = vunpack.c.l.b16 %v333
        %v369 = vunpack.c.h.b16 %v333
        %v370 = vpack.c.b16 %v356, %v354
        %v371 = vpack.c.b16 %v357, %v355
        %v372 = vpack.c.b16 %v360, %v358
        %v373 = vpack.c.b16 %v361, %v359
        %v374 = vpack.c.b16 %v364, %v362
        %v375 = vpack.c.b16 %v365, %v363
        %v376 = vpack.c.b16 %v368, %v366
        %v377 = vpack.c.b16 %v369, %v367
        %vm386 = vcmask 523264
        %v388 = vsel %vm386, %v325, 0
        %390 = vmatprep.subr.bf16.mxu0 0
        %391 = vmatpush1.bf16.msra.mxu0 0
        %392 = vmatprep.subr.bf16.mxu0 0
        %393 = vmatpush1.bf16.msra.mxu0 0
        %394 = vmatprep.subr.bf16.mxu0 0
        %395 = vmatpush1.bf16.msra.mxu0 0
        %396 = vmatprep.subr.bf16.mxu0 0
        %397 = vmatpush1.bf16.msra.mxu0 0
        %398 = vmatprep.subr.bf16.mxu0 %v377
        %399 = vmatpush1.bf16.msra.mxu0 %v376
        %400 = vmatprep.subr.bf16.mxu0 %v375
        %401 = vmatpush1.bf16.msra.mxu0 %v374
        %402 = vmatprep.subr.bf16.mxu0 %v373
        %403 = vmatpush1.bf16.msra.mxu0 %v372
        %404 = vmatprep.subr.bf16.mxu0 %v371
        %405 = vmatpush1.bf16.msra.mxu0 %v370
        %406 = vmatprep.subr.bf16.mxu0 0
        %407 = vmatpush2.bf16.msra.mxu0 0
        %408 = vmatprep.subr.bf16.mxu0 0
        %409 = vmatpush2.bf16.msra.mxu0 0
        %410 = vmatprep.subr.bf16.mxu0 0
        %411 = vmatpush2.bf16.msra.mxu0 0
        %412 = vmatprep.subr.bf16.mxu0 0
        %413 = vmatpush2.bf16.msra.mxu0 0
        %414 = vmatprep.subr.bf16.mxu0 0
        %415 = vmatpush2.bf16.msra.mxu0 0
        %416 = vmatprep.subr.bf16.mxu0 0
        %417 = vmatpush2.bf16.msra.mxu0 0
        %418 = vmatprep.subr.bf16.mxu0 0
        %419 = vmatpush2.bf16.msra.mxu0 0
        %420 = vmatprep.subr.bf16.mxu0 0
        %421 = vmatpush2.bf16.msra.mxu0 0
        %422 = vmatprep.mubr.bf16.mxu0 0
        %423 = vmatmul.mubr.bf16.gmra.mxu0 %v388
        %v424 = vpop.f32.mrf.mxu0
        %v425 = vadd.f32 %v339, %v424
        %v426 = vpop.f32.mrf.mxu0
        %v427 = vadd.f32 %v343, %v426
        %v428 = vpop.f32.mrf.mxu0
        %v429 = vpop.f32.mrf.mxu0
        %430 = vdwg.mxu0
        %v431 = vmax.f32 %v425, 0.0
        %v432 = vmax.f32 %v427, 0.0
        %v433 = vld [vmem:[#allocation2] sm:$0xff]
        %v434 = vpack.c.bf16 %v431, %v431
        %v435 = vpack.c.bf16 %v432, %v432
        %v436 = vld [vmem:[#allocation8] sm:$0xf]
        %v437 = vld [vmem:[#allocation8 + $0x4] sm:$0xf]
        %v438 = vld [vmem:[#allocation8 + $0x8] sm:$0xf]
        %v439 = vld [vmem:[#allocation8 + $0xc] sm:$0xf]
        %v440 = vld [vmem:[#allocation8 + $0x10] sm:$0xf]
        %v441 = vld [vmem:[#allocation8 + $0x14] sm:$0xf]
        %v442 = vld [vmem:[#allocation8 + $0x18] sm:$0xf]
        %v443 = vld [vmem:[#allocation8 + $0x1c] sm:$0xf]
        %v444 = vld [vmem:[#allocation8 + $0x20] sm:$0xf]
        %v445 = vld [vmem:[#allocation8 + $0x24] sm:$0xf]
        %v446 = vld [vmem:[#allocation8 + $0x28] sm:$0xf]
        %v447 = vld [vmem:[#allocation8 + $0x2c] sm:$0xf]
        %v448 = vld [vmem:[#allocation8 + $0x30] sm:$0xf]
        %v449 = vld [vmem:[#allocation8 + $0x34] sm:$0xf]
        %v450 = vld [vmem:[#allocation8 + $0x38] sm:$0xf]
        %v451 = vld [vmem:[#allocation8 + $0x3c] sm:$0xf]
        %v452 = vld [vmem:[#allocation8 + $0x40] sm:$0xf]
        %v453 = vld [vmem:[#allocation8 + $0x44] sm:$0xf]
        %v454 = vld [vmem:[#allocation8 + $0x48] sm:$0xf]
        %v455 = vld [vmem:[#allocation8 + $0x4c] sm:$0xf]
        %v456 = vld [vmem:[#allocation8 + $0x50] sm:$0xf]
        %v457 = vld [vmem:[#allocation8 + $0x54] sm:$0xf]
        %v458 = vld [vmem:[#allocation8 + $0x58] sm:$0xf]
        %v459 = vld [vmem:[#allocation8 + $0x5c] sm:$0xf]
        %v460 = vld [vmem:[#allocation8 + $0x60] sm:$0xf]
        %v461 = vld [vmem:[#allocation8 + $0x64] sm:$0xf]
        %v462 = vld [vmem:[#allocation8 + $0x68] sm:$0xf]
        %v463 = vld [vmem:[#allocation8 + $0x6c] sm:$0xf]
        %v464 = vld [vmem:[#allocation8 + $0x70] sm:$0xf]
        %v465 = vld [vmem:[#allocation8 + $0x74] sm:$0xf]
        %v466 = vld [vmem:[#allocation8 + $0x78] sm:$0xf]
        %v467 = vld [vmem:[#allocation8 + $0x7c] sm:$0xf]
        %v500 = vunpack.c.l.b16 %v436
        %v501 = vunpack.c.l.b16 %v437
        %v502 = vunpack.c.l.b16 %v438
        %v503 = vunpack.c.l.b16 %v439
        %v504 = vunpack.c.l.b16 %v440
        %v505 = vunpack.c.l.b16 %v441
        %v506 = vunpack.c.l.b16 %v442
        %v507 = vunpack.c.l.b16 %v443
        %v508 = vunpack.c.l.b16 %v444
        %v509 = vunpack.c.l.b16 %v445
        %v510 = vunpack.c.l.b16 %v446
        %v511 = vunpack.c.l.b16 %v447
        %v512 = vunpack.c.l.b16 %v448
        %v513 = vunpack.c.l.b16 %v449
        %v514 = vunpack.c.l.b16 %v450
        %v515 = vunpack.c.l.b16 %v451
        %v516 = vunpack.c.l.b16 %v452
        %v517 = vunpack.c.l.b16 %v453
        %v518 = vunpack.c.l.b16 %v454
        %v519 = vunpack.c.l.b16 %v455
        %v520 = vunpack.c.l.b16 %v456
        %v521 = vunpack.c.l.b16 %v457
        %v522 = vunpack.c.l.b16 %v458
        %v523 = vunpack.c.l.b16 %v459
        %v524 = vunpack.c.l.b16 %v460
        %v525 = vunpack.c.l.b16 %v461
        %v526 = vunpack.c.l.b16 %v462
        %v527 = vunpack.c.l.b16 %v463
        %v528 = vunpack.c.l.b16 %v464
        %v529 = vunpack.c.l.b16 %v465
        %v530 = vunpack.c.l.b16 %v466
        %v531 = vunpack.c.l.b16 %v467
        %v532 = vpack.c.b16 %v501, %v500
        %v533 = vpack.c.b16 %v503, %v502
        %v534 = vpack.c.b16 %v505, %v504
        %v535 = vpack.c.b16 %v507, %v506
        %v536 = vpack.c.b16 %v509, %v508
        %v537 = vpack.c.b16 %v511, %v510
        %v538 = vpack.c.b16 %v513, %v512
        %v539 = vpack.c.b16 %v515, %v514
        %v540 = vpack.c.b16 %v517, %v516
        %v541 = vpack.c.b16 %v519, %v518
        %v542 = vpack.c.b16 %v521, %v520
        %v543 = vpack.c.b16 %v523, %v522
        %v544 = vpack.c.b16 %v525, %v524
        %v545 = vpack.c.b16 %v527, %v526
        %v546 = vpack.c.b16 %v529, %v528
        %v547 = vpack.c.b16 %v531, %v530
        %564 = vmatprep.subr.bf16.mxu0 0
        %565 = vmatpush1.bf16.msra.mxu0 %v539
        %566 = vmatprep.subr.bf16.mxu0 0
        %567 = vmatpush1.bf16.msra.mxu0 %v538
        %568 = vmatprep.subr.bf16.mxu0 0
        %569 = vmatpush1.bf16.msra.mxu0 %v537
        %570 = vmatprep.subr.bf16.mxu0 0
        %571 = vmatpush1.bf16.msra.mxu0 %v536
        %572 = vmatprep.subr.bf16.mxu0 0
        %573 = vmatpush1.bf16.msra.mxu0 %v535
        %574 = vmatprep.subr.bf16.mxu0 0
        %575 = vmatpush1.bf16.msra.mxu0 %v534
        %576 = vmatprep.subr.bf16.mxu0 0
        %577 = vmatpush1.bf16.msra.mxu0 %v533
        %578 = vmatprep.subr.bf16.mxu0 0
        %579 = vmatpush1.bf16.msra.mxu0 %v532
        %580 = vmatprep.subr.bf16.mxu0 0
        %581 = vmatpush2.bf16.msra.mxu0 %v547
        %582 = vmatprep.subr.bf16.mxu0 0
        %583 = vmatpush2.bf16.msra.mxu0 %v546
        %584 = vmatprep.subr.bf16.mxu0 0
        %585 = vmatpush2.bf16.msra.mxu0 %v545
        %586 = vmatprep.subr.bf16.mxu0 0
        %587 = vmatpush2.bf16.msra.mxu0 %v544
        %588 = vmatprep.subr.bf16.mxu0 0
        %589 = vmatpush2.bf16.msra.mxu0 %v543
        %590 = vmatprep.subr.bf16.mxu0 0
        %591 = vmatpush2.bf16.msra.mxu0 %v542
        %592 = vmatprep.subr.bf16.mxu0 0
        %593 = vmatpush2.bf16.msra.mxu0 %v541
        %594 = vmatprep.subr.bf16.mxu0 0
        %595 = vmatpush2.bf16.msra.mxu0 %v540
        %596 = vmatprep.mubr.bf16.mxu0 %v435
        %597 = vmatmul.mubr.bf16.gmra.mxu0 %v434
        %v598 = vpop.f32.mrf.mxu0
        %v599 = vadd.f32 0.0, %v598
        %v600 = vpop.f32.mrf.mxu0
        %v601 = vpop.f32.mrf.mxu0
        %v602 = vpop.f32.mrf.mxu0
        %603 = vdwg.mxu0
        %v604 = vadd.f32 %v433, %v599
        %605 = vst [vmem:[#allocation2] sm:$0xff] %v604
        // Predicated region
        $region57: #{tpu_custom_call.1} parent=39 // pred_check
          %p606 = pneg %p319
        $region58: #{tpu_custom_call.1} parent=39 // pred_check_branch
          %608 = sbr.rel (%p606) target = $region60
        $region59: #{tpu_custom_call.1} parent=39 // pred_region
          %v609 = vld [vmem:[#allocation2] sm:$0xff]
          %v610 = vld [vmem:[%s4] sm:$0x1]
          %v612 = vlaneseq
          %v613 = vshrl.u32 %v612, 7
          %v614 = vsub.s32 0, %v613
          %v615 = vrot.slane %v610, %v614
          %v617 = vadd.f32 %v609, %v615
          %618 = vst [vmem:[%s310] sm:$0xff] %v617
        $region60: #{tpu_custom_call.1} parent=39 // pred_fallthru
          _
        %s619 = sand.u32 %s168, 1
        %s620 = scalar_lea.sflag [#allocation5], %s619
        %s621 = sand.u32 %s168, 1
        %s622 = smul.addr %s621, 8
        %s623 = scalar_lea.vmem [#allocation9], %s622
        // Predicated region
        $region61: #{tpu_custom_call.1} parent=39 // pred_check
          %p624 = pneg %p178
        $region62: #{tpu_custom_call.1} parent=39 // pred_check_branch
          %626 = sbr.rel (%p624) target = $region64
        $region63: #{tpu_custom_call.1} parent=39 // pred_region
          %s628 = ssub.s32 128, 128
          %629 = vsyncadd %s620, %s628
          %s630 = smul.addr %s27, 128
          %s631 = scalar_lea.hbm %s5, %s630
          %s633 = sshll.u32 %s623, 4
          %s634 = int_to_ptr.vmem [resolvable:$true] %s633
          %636 = dma.vmem_to_hbm [thread:$0]  %s634, 128, %s631, %s620
        $region64: #{tpu_custom_call.1} parent=39 // pred_fallthru
          _
      $region40: #{tpu_custom_call.1} parent=5 // pred_fallthru
        _
      %p637 = scmp.le.s32.totalorder 2, %s18
      // Predicated region
      $region65: #{tpu_custom_call.1} parent=5 // pred_check
        %p638 = pneg %p637
      $region66: #{tpu_custom_call.1} parent=5 // pred_check_branch
        %640 = sbr.rel (%p638) target = $region68
      $region67: #{tpu_custom_call.1} parent=5 // pred_region
        %s641 = ssub.s32 %s18, 2
        // Predicated region
        $region69: #{tpu_custom_call.1} parent=67 // pred_check
          %p642 = pneg %p184
        $region70: #{tpu_custom_call.1} parent=67 // pred_check_branch
          %644 = sbr.rel (%p642) target = $region72
        $region71: #{tpu_custom_call.1} parent=67 // pred_region
          %s645 = sand.u32 %s169, 1
          %s646 = scalar_lea.sflag [#allocation5], %s645
          %s647 = sand.u32 %s169, 1
          %s648 = smul.addr %s647, 8
          %s649 = scalar_lea.vmem [#allocation9], %s648
          %650 = dma.done %s646, 128
        $region72: #{tpu_custom_call.1} parent=67 // pred_fallthru
          _
      $region68: #{tpu_custom_call.1} parent=5 // pred_fallthru
        _
    $region6: #{tpu_custom_call.1} parent=1 // loop_footer
      %s22 = sadd.s32 1, %s18
    $region7: #{tpu_custom_call.1} parent=1 // loop_footer_branch
      %17 = sbr.rel target = $region3
    $region8: #{tpu_custom_call.1} parent=1 // loop_exit
      _
    %651 = vsyncpa [#allocation4], 1
    %s652 = scalar_lea.sflag [#allocation4], 1
    %653 = vsyncpa %s652, 1
    %654 = vsyncpa [#allocation7], 1
    %655 = vsyncpa [#allocation5], 1
    %s656 = scalar_lea.sflag [#allocation5], 1
    %657 = vsyncpa %s656, 1

</llo_original>
